<compile_context>
chip_gen: v7x
topology: tpu7x:2x2x1
jax: 0.10.0
libtpu: 0.0.40
codegen_flags: <defaults>
</compile_context>

<pallas_src>
import functools

import jax
import jax.numpy as jnp
import numpy as np
from jax.experimental import pallas as pl
from jax.experimental.pallas import tpu as pltpu


def _ar_linear_kernel(hs_ref, wh_ref, t_ref, out_ref):
    """Greedy AR decode for one BLOCK of batch rows in a single invocation.

    hs_ref : (1, S*Bb, H)  segment embeddings, step-major: row i*Bb + r holds
                           (step i, batch row r) of this block.
    wh_ref : (H, L)        linear weight, hidden part (pre-transposed).
    t_ref  : (L, L)        T[j] = label_embeddings[j] @ We^T + bias (folded).
    out_ref: (1, Bb, S*L)  lane-dense logits: out[0, r, i*L:(i+1)*L] = step i.
    """
    Bb = out_ref.shape[1]
    L = t_ref.shape[-1]
    S = out_ref.shape[2] // L

    # Carry-independent part hoisted out of the recurrence: ONE
    # (S*Bb, H) @ (H, L) MXU matmul covering every step and row of this block.
    seg = jnp.dot(hs_ref[0], wh_ref[...],
                  preferred_element_type=jnp.float32)          # (S*Bb, L)

    t = t_ref[...]                                             # (L, L) VMEM resident
    lane = jax.lax.broadcasted_iota(jnp.int32, (Bb, L), 1)     # (Bb, L)
    carry = jnp.broadcast_to(t[0:1, :], (Bb, L))               # start label id = 0 (bias folded in)

    # Sequential recurrence over steps, vectorized across the Bb batch rows,
    # fully unrolled (S small & static). Per step: VPU add, lane argmax, and a
    # tiny one-hot row gather of T (latency amortized over Bb rows).
    for i in range(S):
        logit = seg[i * Bb:(i + 1) * Bb, :] + carry            # (Bb, L)
        # Direct per-step store into the output tile (off the critical path);
        # no end-of-kernel concatenate / sublane shuffles.
        out_ref[0, :, pl.ds(i * L, L)] = logit.astype(out_ref.dtype)
        # argmax(softmax(logit)) == argmax(logit); min-index tie-break matches
        # torch.argmax (NaN logits would differ — not expected here).
        mx = jnp.max(logit, axis=-1, keepdims=True)            # (Bb, 1)
        pred = jnp.min(jnp.where(logit == mx, lane, jnp.int32(L)),
                       axis=-1, keepdims=True)                 # (Bb, 1)
        onehot = (lane == pred).astype(jnp.float32)            # (Bb, L)
        carry = jnp.dot(onehot, t,
                        preferred_element_type=jnp.float32)    # (Bb, L) = T[pred]


def prepare_params(emb_table, linear_w, linear_b, hidden_dim):
    """One-time weight preprocessing, kept OUT of the per-call forward path.

    Returns:
      wh: (H, L)  hidden half of the linear layer, transposed.
      t : (L, L)  folded table T[j] = label_emb[j] @ We^T + b, so that per-step
                  logits are  hs @ Wh + T[prev_pred].
    """
    H = hidden_dim
    wh = jnp.asarray(linear_w[:, :H], jnp.float32).T           # (H, L)
    we = jnp.asarray(linear_w[:, H:], jnp.float32).T           # (E, L)
    t = (jnp.asarray(emb_table, jnp.float32) @ we
         + jnp.asarray(linear_b, jnp.float32)[None, :])        # (L, L)
    return wh, t


def default_grid_steps(batch):
    """1 grid step on single-TC chips (v5e/v6e); 2-way batch grid on v7x."""
    try:
        kind = jax.devices()[0].device_kind.lower()
    except Exception:
        return 1
    n_tc = 2 if "v7" in kind else 1
    g = min(batch, n_tc)
    while g > 1 and batch % g:
        g -= 1
    return max(g, 1)


@functools.partial(jax.jit, static_argnames=("grid_steps",))
def sequential_classifier_forward(hidden_states, wh, t, *, grid_steps=1):
    """hidden_states: (B,S,H) f32; wh: (H,L), t: (L,L) from prepare_params."""
    B, S, H = hidden_states.shape
    L = t.shape[-1]

    G = grid_steps if (grid_steps >= 1 and B % grid_steps == 0) else 1
    Bb = B // G

    # Step-major, batch-blocked layout: row i*Bb + r of block g is
    # hidden_states[g*Bb + r, i, :], so each step's rows are one contiguous
    # sublane slice of the hoisted matmul result (pure layout plumbing).
    hs = (jnp.asarray(hidden_states, jnp.float32)
          .reshape(G, Bb, S, H)
          .transpose(0, 2, 1, 3)                               # (G, S, Bb, H)
          .reshape(G, S * Bb, H))

    out = pl.pallas_call(
        _ar_linear_kernel,
        # Lane-dense output slab (Bb rows x S*L lanes per grid step).
        out_shape=jax.ShapeDtypeStruct((G, Bb, S * L), jnp.float32),
        grid_spec=pltpu.PrefetchScalarGridSpec(
            num_scalar_prefetch=0,
            grid=(G,),
            in_specs=[
                pl.BlockSpec((1, S * Bb, H), lambda g: (g, 0, 0)),
                # Constant blocks (same index every step) are fetched once.
                pl.BlockSpec((H, L), lambda g: (0, 0)),
                pl.BlockSpec((L, L), lambda g: (0, 0)),
            ],
            out_specs=pl.BlockSpec((1, Bb, S * L), lambda g: (g, 0, 0)),
        ),
        compiler_params=pltpu.CompilerParams(
            # Batch blocks are independent -> megacore-shardable on v7x; the
            # sequential dependence (over S) is entirely inside one invocation.
            dimension_semantics=("parallel",),
        ),
    )(hs, wh, t)

    return out.reshape(B, S, L)                                # (B, S, L)


def reference_forward(hidden_states, emb_table, linear_w, linear_b):
    """Pure-JAX reference of the PyTorch eval-mode forward (labels=None)."""
    B, S, H = hidden_states.shape
    L, E = emb_table.shape
    start = jnp.broadcast_to(emb_table[0], (B, E))

    def step(carry, hs_t):
        x = jnp.concatenate([hs_t, carry], axis=-1)            # (B, H+E)
        logit = x @ linear_w.T + linear_b                      # (B, L)
        probs = jax.nn.softmax(logit, axis=-1)
        pred = jnp.argmax(probs, axis=-1)                      # (B,)
        return emb_table[pred], logit

    _, logits = jax.lax.scan(step, start, jnp.transpose(hidden_states, (1, 0, 2)))
    return jnp.transpose(logits, (1, 0, 2))                    # (B, S, L)


if __name__ == "__main__":
    # Module config (small, consistent with __init__):
    num_labels = 8
    label_embedding_dim = 16
    hidden_dim = 32
    # Input config
    batch, seq = 2, 8

    key = jax.random.PRNGKey(0)
    k_hs, k_emb, k_w, k_b = jax.random.split(key, 4)

    hidden_states = jax.random.normal(k_hs, (batch, seq, hidden_dim), dtype=jnp.float32)
    # Deterministic synthetic parameters (no checkpoint load).
    emb_table = jax.random.normal(k_emb, (num_labels, label_embedding_dim),
                                  dtype=jnp.float32)
    fan_in = hidden_dim + label_embedding_dim
    bound = 1.0 / np.sqrt(fan_in)
    linear_w = jax.random.uniform(k_w, (num_labels, fan_in),
                                  minval=-bound, maxval=bound, dtype=jnp.float32)
    linear_b = jax.random.uniform(k_b, (num_labels,),
                                  minval=-bound, maxval=bound, dtype=jnp.float32)

    # One-time parameter preprocessing, outside the per-call forward path.
    wh, t = jax.block_until_ready(prepare_params(emb_table, linear_w, linear_b,
                                                 hidden_dim))

    g = default_grid_steps(batch)
    out = sequential_classifier_forward(hidden_states, wh, t, grid_steps=g)
    out = jax.block_until_ready(out)

    ref = reference_forward(hidden_states, emb_table, linear_w, linear_b)
    ref = jax.block_until_ready(ref)

    assert out.shape == (batch, seq, num_labels), out.shape
    np.testing.assert_allclose(np.asarray(out), np.asarray(ref), rtol=1e-4, atol=1e-4)

    print("KERNEL_OK")
</pallas_src>

<mosaic_0001>
module attributes {stable_mosaic.version = 11 : i64} {
  func.func @_ar_linear_kernel(%arg0: i32, %arg1: memref<1x16x32xf32, #tpu.memory_space<vmem>>, %arg2: memref<32x8xf32, #tpu.memory_space<vmem>>, %arg3: memref<8x8xf32, #tpu.memory_space<vmem>>, %arg4: memref<1x2x64xf32, #tpu.memory_space<vmem>>) attributes {dimension_semantics = [#tpu.dimension_semantics<parallel>], iteration_bounds = array<i64: 1>, scalar_prefetch = 0 : i64, scratch_operands = 0 : i64, tpu.core_type = #tpu.core_type<tc>, window_params = [{transform_indices = @transform_0, window_bounds = array<i64: 1, 16, 32>}, {pipeline_mode = #tpu.pipeline_mode<synchronous>, transform_indices = @transform_1, window_bounds = array<i64: 32, 8>}, {pipeline_mode = #tpu.pipeline_mode<synchronous>, transform_indices = @transform_2, window_bounds = array<i64: 8, 8>}, {transform_indices = @transform_3, window_bounds = array<i64: 1, 2, 64>}]} {
    %c0 = arith.constant 0 : index
    %c0_0 = arith.constant 0 : index
    %c0_1 = arith.constant 0 : index
    %0 = vector.load %arg1[%c0, %c0_0, %c0_1] : memref<1x16x32xf32, #tpu.memory_space<vmem>>, vector<1x16x32xf32>
    %1 = vector.shape_cast %0 : vector<1x16x32xf32> to vector<16x32xf32>
    %c0_2 = arith.constant 0 : index
    %c0_3 = arith.constant 0 : index
    %2 = vector.load %arg2[%c0_2, %c0_3] : memref<32x8xf32, #tpu.memory_space<vmem>>, vector<32x8xf32>
    %cst = arith.constant dense<0.000000e+00> : vector<16x8xf32>
    %3 = tpu.matmul %1, %2, %cst {dimension_numbers = #tpu.dot_dimension_numbers<[1], [0], [0], [1], [0, 0, 1, 1], [], []>} : vector<16x32xf32>, vector<32x8xf32>, vector<16x8xf32> -> vector<16x8xf32>
    %c0_4 = arith.constant 0 : index
    %c0_5 = arith.constant 0 : index
    %4 = vector.load %arg3[%c0_4, %c0_5] : memref<8x8xf32, #tpu.memory_space<vmem>>, vector<8x8xf32>
    %5 = tpu.iota {dimensions = array<i32: 1>} : vector<2x8xi32>
    %6 = vector.extract_strided_slice %4 {offsets = [0, 0], sizes = [1, 8], strides = [1, 1]} : vector<8x8xf32> to vector<1x8xf32>
    %7 = vector.shape_cast %6 : vector<1x8xf32> to vector<1x8xf32>
    %8 = vector.broadcast %7 : vector<1x8xf32> to vector<2x8xf32>
    %9 = vector.extract_strided_slice %3 {offsets = [0, 0], sizes = [2, 8], strides = [1, 1]} : vector<16x8xf32> to vector<2x8xf32>
    %10 = arith.addf %9, %8 : vector<2x8xf32>
    %c0_6 = arith.constant 0 : index
    %c0_7 = arith.constant 0 : index
    %c0_8 = arith.constant 0 : index
    %11 = vector.load %arg4[%c0_6, %c0_7, %c0_8] : memref<1x2x64xf32, #tpu.memory_space<vmem>>, vector<1x2x8xf32>
    %12 = vector.shape_cast %11 : vector<1x2x8xf32> to vector<2x8xf32>
    %13 = vector.shape_cast %10 : vector<2x8xf32> to vector<1x2x8xf32>
    tpu.vector_store %arg4[%c0_6, %c0_7, %c0_8], %13 {strides = array<i32>} : memref<1x2x64xf32, #tpu.memory_space<vmem>>, vector<1x2x8xf32>,
    %cst_9 = arith.constant dense<0xFF800000> : vector<2xf32>
    %14 = vector.multi_reduction <maximumf>, %10, %cst_9 [1] : vector<2x8xf32> to vector<2xf32>
    %15 = vector.shape_cast %14 : vector<2xf32> to vector<2x1xf32>
    %16 = vector.broadcast %15 : vector<2x1xf32> to vector<2x8xf32>
    %17 = arith.cmpf oeq, %10, %16 : vector<2x8xf32>
    %c8_i32 = arith.constant 8 : i32
    %18 = vector.broadcast %c8_i32 : i32 to vector<2x8xi32>
    %19 = arith.select %17, %5, %18 : vector<2x8xi1>, vector<2x8xi32>
    %cst_10 = arith.constant dense<2147483647> : vector<2xi32>
    %20 = vector.multi_reduction <minsi>, %19, %cst_10 [1] : vector<2x8xi32> to vector<2xi32>
    %21 = vector.shape_cast %20 : vector<2xi32> to vector<2x1xi32>
    %22 = vector.broadcast %21 : vector<2x1xi32> to vector<2x8xi32>
    %23 = arith.cmpi eq, %5, %22 : vector<2x8xi32>
    %24 = arith.extui %23 : vector<2x8xi1> to vector<2x8xi32>
    %25 = arith.sitofp %24 : vector<2x8xi32> to vector<2x8xf32>
    %cst_11 = arith.constant dense<0.000000e+00> : vector<2x8xf32>
    %26 = tpu.matmul %25, %4, %cst_11 {dimension_numbers = #tpu.dot_dimension_numbers<[1], [0], [0], [1], [0, 0, 1, 1], [], []>} : vector<2x8xf32>, vector<8x8xf32>, vector<2x8xf32> -> vector<2x8xf32>
    %27 = vector.extract_strided_slice %3 {offsets = [2, 0], sizes = [2, 8], strides = [1, 1]} : vector<16x8xf32> to vector<2x8xf32>
    %28 = arith.addf %27, %26 : vector<2x8xf32>
    %c0_12 = arith.constant 0 : index
    %c0_13 = arith.constant 0 : index
    %c8 = arith.constant 8 : index
    %29 = vector.load %arg4[%c0_12, %c0_13, %c8] : memref<1x2x64xf32, #tpu.memory_space<vmem>>, vector<1x2x8xf32>
    %30 = vector.shape_cast %29 : vector<1x2x8xf32> to vector<2x8xf32>
    %31 = vector.shape_cast %28 : vector<2x8xf32> to vector<1x2x8xf32>
    tpu.vector_store %arg4[%c0_12, %c0_13, %c8], %31 {strides = array<i32>} : memref<1x2x64xf32, #tpu.memory_space<vmem>>, vector<1x2x8xf32>,
    %cst_14 = arith.constant dense<0xFF800000> : vector<2xf32>
    %32 = vector.multi_reduction <maximumf>, %28, %cst_14 [1] : vector<2x8xf32> to vector<2xf32>
    %33 = vector.shape_cast %32 : vector<2xf32> to vector<2x1xf32>
    %34 = vector.broadcast %33 : vector<2x1xf32> to vector<2x8xf32>
    %35 = arith.cmpf oeq, %28, %34 : vector<2x8xf32>
    %c8_i32_15 = arith.constant 8 : i32
    %36 = vector.broadcast %c8_i32_15 : i32 to vector<2x8xi32>
    %37 = arith.select %35, %5, %36 : vector<2x8xi1>, vector<2x8xi32>
    %cst_16 = arith.constant dense<2147483647> : vector<2xi32>
    %38 = vector.multi_reduction <minsi>, %37, %cst_16 [1] : vector<2x8xi32> to vector<2xi32>
    %39 = vector.shape_cast %38 : vector<2xi32> to vector<2x1xi32>
    %40 = vector.broadcast %39 : vector<2x1xi32> to vector<2x8xi32>
    %41 = arith.cmpi eq, %5, %40 : vector<2x8xi32>
    %42 = arith.extui %41 : vector<2x8xi1> to vector<2x8xi32>
    %43 = arith.sitofp %42 : vector<2x8xi32> to vector<2x8xf32>
    %cst_17 = arith.constant dense<0.000000e+00> : vector<2x8xf32>
    %44 = tpu.matmul %43, %4, %cst_17 {dimension_numbers = #tpu.dot_dimension_numbers<[1], [0], [0], [1], [0, 0, 1, 1], [], []>} : vector<2x8xf32>, vector<8x8xf32>, vector<2x8xf32> -> vector<2x8xf32>
    %45 = vector.extract_strided_slice %3 {offsets = [4, 0], sizes = [2, 8], strides = [1, 1]} : vector<16x8xf32> to vector<2x8xf32>
    %46 = arith.addf %45, %44 : vector<2x8xf32>
    %c0_18 = arith.constant 0 : index
    %c0_19 = arith.constant 0 : index
    %c16 = arith.constant 16 : index
    %47 = vector.load %arg4[%c0_18, %c0_19, %c16] : memref<1x2x64xf32, #tpu.memory_space<vmem>>, vector<1x2x8xf32>
    %48 = vector.shape_cast %47 : vector<1x2x8xf32> to vector<2x8xf32>
    %49 = vector.shape_cast %46 : vector<2x8xf32> to vector<1x2x8xf32>
    tpu.vector_store %arg4[%c0_18, %c0_19, %c16], %49 {strides = array<i32>} : memref<1x2x64xf32, #tpu.memory_space<vmem>>, vector<1x2x8xf32>,
    %cst_20 = arith.constant dense<0xFF800000> : vector<2xf32>
    %50 = vector.multi_reduction <maximumf>, %46, %cst_20 [1] : vector<2x8xf32> to vector<2xf32>
    %51 = vector.shape_cast %50 : vector<2xf32> to vector<2x1xf32>
    %52 = vector.broadcast %51 : vector<2x1xf32> to vector<2x8xf32>
    %53 = arith.cmpf oeq, %46, %52 : vector<2x8xf32>
    %c8_i32_21 = arith.constant 8 : i32
    %54 = vector.broadcast %c8_i32_21 : i32 to vector<2x8xi32>
    %55 = arith.select %53, %5, %54 : vector<2x8xi1>, vector<2x8xi32>
    %cst_22 = arith.constant dense<2147483647> : vector<2xi32>
    %56 = vector.multi_reduction <minsi>, %55, %cst_22 [1] : vector<2x8xi32> to vector<2xi32>
    %57 = vector.shape_cast %56 : vector<2xi32> to vector<2x1xi32>
    %58 = vector.broadcast %57 : vector<2x1xi32> to vector<2x8xi32>
    %59 = arith.cmpi eq, %5, %58 : vector<2x8xi32>
    %60 = arith.extui %59 : vector<2x8xi1> to vector<2x8xi32>
    %61 = arith.sitofp %60 : vector<2x8xi32> to vector<2x8xf32>
    %cst_23 = arith.constant dense<0.000000e+00> : vector<2x8xf32>
    %62 = tpu.matmul %61, %4, %cst_23 {dimension_numbers = #tpu.dot_dimension_numbers<[1], [0], [0], [1], [0, 0, 1, 1], [], []>} : vector<2x8xf32>, vector<8x8xf32>, vector<2x8xf32> -> vector<2x8xf32>
    %63 = vector.extract_strided_slice %3 {offsets = [6, 0], sizes = [2, 8], strides = [1, 1]} : vector<16x8xf32> to vector<2x8xf32>
    %64 = arith.addf %63, %62 : vector<2x8xf32>
    %c0_24 = arith.constant 0 : index
    %c0_25 = arith.constant 0 : index
    %c24 = arith.constant 24 : index
    %65 = vector.load %arg4[%c0_24, %c0_25, %c24] : memref<1x2x64xf32, #tpu.memory_space<vmem>>, vector<1x2x8xf32>
    %66 = vector.shape_cast %65 : vector<1x2x8xf32> to vector<2x8xf32>
    %67 = vector.shape_cast %64 : vector<2x8xf32> to vector<1x2x8xf32>
    tpu.vector_store %arg4[%c0_24, %c0_25, %c24], %67 {strides = array<i32>} : memref<1x2x64xf32, #tpu.memory_space<vmem>>, vector<1x2x8xf32>,
    %cst_26 = arith.constant dense<0xFF800000> : vector<2xf32>
    %68 = vector.multi_reduction <maximumf>, %64, %cst_26 [1] : vector<2x8xf32> to vector<2xf32>
    %69 = vector.shape_cast %68 : vector<2xf32> to vector<2x1xf32>
    %70 = vector.broadcast %69 : vector<2x1xf32> to vector<2x8xf32>
    %71 = arith.cmpf oeq, %64, %70 : vector<2x8xf32>
    %c8_i32_27 = arith.constant 8 : i32
    %72 = vector.broadcast %c8_i32_27 : i32 to vector<2x8xi32>
    %73 = arith.select %71, %5, %72 : vector<2x8xi1>, vector<2x8xi32>
    %cst_28 = arith.constant dense<2147483647> : vector<2xi32>
    %74 = vector.multi_reduction <minsi>, %73, %cst_28 [1] : vector<2x8xi32> to vector<2xi32>
    %75 = vector.shape_cast %74 : vector<2xi32> to vector<2x1xi32>
    %76 = vector.broadcast %75 : vector<2x1xi32> to vector<2x8xi32>
    %77 = arith.cmpi eq, %5, %76 : vector<2x8xi32>
    %78 = arith.extui %77 : vector<2x8xi1> to vector<2x8xi32>
    %79 = arith.sitofp %78 : vector<2x8xi32> to vector<2x8xf32>
    %cst_29 = arith.constant dense<0.000000e+00> : vector<2x8xf32>
    %80 = tpu.matmul %79, %4, %cst_29 {dimension_numbers = #tpu.dot_dimension_numbers<[1], [0], [0], [1], [0, 0, 1, 1], [], []>} : vector<2x8xf32>, vector<8x8xf32>, vector<2x8xf32> -> vector<2x8xf32>
    %81 = vector.extract_strided_slice %3 {offsets = [8, 0], sizes = [2, 8], strides = [1, 1]} : vector<16x8xf32> to vector<2x8xf32>
    %82 = arith.addf %81, %80 : vector<2x8xf32>
    %c0_30 = arith.constant 0 : index
    %c0_31 = arith.constant 0 : index
    %c32 = arith.constant 32 : index
    %83 = vector.load %arg4[%c0_30, %c0_31, %c32] : memref<1x2x64xf32, #tpu.memory_space<vmem>>, vector<1x2x8xf32>
    %84 = vector.shape_cast %83 : vector<1x2x8xf32> to vector<2x8xf32>
    %85 = vector.shape_cast %82 : vector<2x8xf32> to vector<1x2x8xf32>
    tpu.vector_store %arg4[%c0_30, %c0_31, %c32], %85 {strides = array<i32>} : memref<1x2x64xf32, #tpu.memory_space<vmem>>, vector<1x2x8xf32>,
    %cst_32 = arith.constant dense<0xFF800000> : vector<2xf32>
    %86 = vector.multi_reduction <maximumf>, %82, %cst_32 [1] : vector<2x8xf32> to vector<2xf32>
    %87 = vector.shape_cast %86 : vector<2xf32> to vector<2x1xf32>
    %88 = vector.broadcast %87 : vector<2x1xf32> to vector<2x8xf32>
    %89 = arith.cmpf oeq, %82, %88 : vector<2x8xf32>
    %c8_i32_33 = arith.constant 8 : i32
    %90 = vector.broadcast %c8_i32_33 : i32 to vector<2x8xi32>
    %91 = arith.select %89, %5, %90 : vector<2x8xi1>, vector<2x8xi32>
    %cst_34 = arith.constant dense<2147483647> : vector<2xi32>
    %92 = vector.multi_reduction <minsi>, %91, %cst_34 [1] : vector<2x8xi32> to vector<2xi32>
    %93 = vector.shape_cast %92 : vector<2xi32> to vector<2x1xi32>
    %94 = vector.broadcast %93 : vector<2x1xi32> to vector<2x8xi32>
    %95 = arith.cmpi eq, %5, %94 : vector<2x8xi32>
    %96 = arith.extui %95 : vector<2x8xi1> to vector<2x8xi32>
    %97 = arith.sitofp %96 : vector<2x8xi32> to vector<2x8xf32>
    %cst_35 = arith.constant dense<0.000000e+00> : vector<2x8xf32>
    %98 = tpu.matmul %97, %4, %cst_35 {dimension_numbers = #tpu.dot_dimension_numbers<[1], [0], [0], [1], [0, 0, 1, 1], [], []>} : vector<2x8xf32>, vector<8x8xf32>, vector<2x8xf32> -> vector<2x8xf32>
    %99 = vector.extract_strided_slice %3 {offsets = [10, 0], sizes = [2, 8], strides = [1, 1]} : vector<16x8xf32> to vector<2x8xf32>
    %100 = arith.addf %99, %98 : vector<2x8xf32>
    %c0_36 = arith.constant 0 : index
    %c0_37 = arith.constant 0 : index
    %c40 = arith.constant 40 : index
    %101 = vector.load %arg4[%c0_36, %c0_37, %c40] : memref<1x2x64xf32, #tpu.memory_space<vmem>>, vector<1x2x8xf32>
    %102 = vector.shape_cast %101 : vector<1x2x8xf32> to vector<2x8xf32>
    %103 = vector.shape_cast %100 : vector<2x8xf32> to vector<1x2x8xf32>
    tpu.vector_store %arg4[%c0_36, %c0_37, %c40], %103 {strides = array<i32>} : memref<1x2x64xf32, #tpu.memory_space<vmem>>, vector<1x2x8xf32>,
    %cst_38 = arith.constant dense<0xFF800000> : vector<2xf32>
    %104 = vector.multi_reduction <maximumf>, %100, %cst_38 [1] : vector<2x8xf32> to vector<2xf32>
    %105 = vector.shape_cast %104 : vector<2xf32> to vector<2x1xf32>
    %106 = vector.broadcast %105 : vector<2x1xf32> to vector<2x8xf32>
    %107 = arith.cmpf oeq, %100, %106 : vector<2x8xf32>
    %c8_i32_39 = arith.constant 8 : i32
    %108 = vector.broadcast %c8_i32_39 : i32 to vector<2x8xi32>
    %109 = arith.select %107, %5, %108 : vector<2x8xi1>, vector<2x8xi32>
    %cst_40 = arith.constant dense<2147483647> : vector<2xi32>
    %110 = vector.multi_reduction <minsi>, %109, %cst_40 [1] : vector<2x8xi32> to vector<2xi32>
    %111 = vector.shape_cast %110 : vector<2xi32> to vector<2x1xi32>
    %112 = vector.broadcast %111 : vector<2x1xi32> to vector<2x8xi32>
    %113 = arith.cmpi eq, %5, %112 : vector<2x8xi32>
    %114 = arith.extui %113 : vector<2x8xi1> to vector<2x8xi32>
    %115 = arith.sitofp %114 : vector<2x8xi32> to vector<2x8xf32>
    %cst_41 = arith.constant dense<0.000000e+00> : vector<2x8xf32>
    %116 = tpu.matmul %115, %4, %cst_41 {dimension_numbers = #tpu.dot_dimension_numbers<[1], [0], [0], [1], [0, 0, 1, 1], [], []>} : vector<2x8xf32>, vector<8x8xf32>, vector<2x8xf32> -> vector<2x8xf32>
    %117 = vector.extract_strided_slice %3 {offsets = [12, 0], sizes = [2, 8], strides = [1, 1]} : vector<16x8xf32> to vector<2x8xf32>
    %118 = arith.addf %117, %116 : vector<2x8xf32>
    %c0_42 = arith.constant 0 : index
    %c0_43 = arith.constant 0 : index
    %c48 = arith.constant 48 : index
    %119 = vector.load %arg4[%c0_42, %c0_43, %c48] : memref<1x2x64xf32, #tpu.memory_space<vmem>>, vector<1x2x8xf32>
    %120 = vector.shape_cast %119 : vector<1x2x8xf32> to vector<2x8xf32>
    %121 = vector.shape_cast %118 : vector<2x8xf32> to vector<1x2x8xf32>
    tpu.vector_store %arg4[%c0_42, %c0_43, %c48], %121 {strides = array<i32>} : memref<1x2x64xf32, #tpu.memory_space<vmem>>, vector<1x2x8xf32>,
    %cst_44 = arith.constant dense<0xFF800000> : vector<2xf32>
    %122 = vector.multi_reduction <maximumf>, %118, %cst_44 [1] : vector<2x8xf32> to vector<2xf32>
    %123 = vector.shape_cast %122 : vector<2xf32> to vector<2x1xf32>
    %124 = vector.broadcast %123 : vector<2x1xf32> to vector<2x8xf32>
    %125 = arith.cmpf oeq, %118, %124 : vector<2x8xf32>
    %c8_i32_45 = arith.constant 8 : i32
    %126 = vector.broadcast %c8_i32_45 : i32 to vector<2x8xi32>
    %127 = arith.select %125, %5, %126 : vector<2x8xi1>, vector<2x8xi32>
    %cst_46 = arith.constant dense<2147483647> : vector<2xi32>
    %128 = vector.multi_reduction <minsi>, %127, %cst_46 [1] : vector<2x8xi32> to vector<2xi32>
    %129 = vector.shape_cast %128 : vector<2xi32> to vector<2x1xi32>
    %130 = vector.broadcast %129 : vector<2x1xi32> to vector<2x8xi32>
    %131 = arith.cmpi eq, %5, %130 : vector<2x8xi32>
    %132 = arith.extui %131 : vector<2x8xi1> to vector<2x8xi32>
    %133 = arith.sitofp %132 : vector<2x8xi32> to vector<2x8xf32>
    %cst_47 = arith.constant dense<0.000000e+00> : vector<2x8xf32>
    %134 = tpu.matmul %133, %4, %cst_47 {dimension_numbers = #tpu.dot_dimension_numbers<[1], [0], [0], [1], [0, 0, 1, 1], [], []>} : vector<2x8xf32>, vector<8x8xf32>, vector<2x8xf32> -> vector<2x8xf32>
    %135 = vector.extract_strided_slice %3 {offsets = [14, 0], sizes = [2, 8], strides = [1, 1]} : vector<16x8xf32> to vector<2x8xf32>
    %136 = arith.addf %135, %134 : vector<2x8xf32>
    %c0_48 = arith.constant 0 : index
    %c0_49 = arith.constant 0 : index
    %c56 = arith.constant 56 : index
    %137 = vector.load %arg4[%c0_48, %c0_49, %c56] : memref<1x2x64xf32, #tpu.memory_space<vmem>>, vector<1x2x8xf32>
    %138 = vector.shape_cast %137 : vector<1x2x8xf32> to vector<2x8xf32>
    %139 = vector.shape_cast %136 : vector<2x8xf32> to vector<1x2x8xf32>
    tpu.vector_store %arg4[%c0_48, %c0_49, %c56], %139 {strides = array<i32>} : memref<1x2x64xf32, #tpu.memory_space<vmem>>, vector<1x2x8xf32>,
    return
  }
  func.func @transform_0(%arg0: i32) -> (i32, i32, i32) {
    %c0_i32 = arith.constant 0 : i32
    %c0_i32_0 = arith.constant 0 : i32
    %c0_i32_1 = arith.constant 0 : i32
    return %arg0, %c0_i32, %c0_i32_0 : i32, i32, i32
  }
  func.func @transform_1(%arg0: i32) -> (i32, i32) {
    %c0_i32 = arith.constant 0 : i32
    %c0_i32_0 = arith.constant 0 : i32
    %c0_i32_1 = arith.constant 0 : i32
    return %c0_i32, %c0_i32_0 : i32, i32
  }
  func.func @transform_2(%arg0: i32) -> (i32, i32) {
    %c0_i32 = arith.constant 0 : i32
    %c0_i32_0 = arith.constant 0 : i32
    %c0_i32_1 = arith.constant 0 : i32
    return %c0_i32, %c0_i32_0 : i32, i32
  }
  func.func @transform_3(%arg0: i32) -> (i32, i32, i32) {
    %c0_i32 = arith.constant 0 : i32
    %c0_i32_0 = arith.constant 0 : i32
    %c0_i32_1 = arith.constant 0 : i32
    return %arg0, %c0_i32, %c0_i32_0 : i32, i32, i32
  }
}

</mosaic_0001>

<llo_original>
// kernel: sequential_classifier_forward.1
$region0: #{sequential_classifier_forward.1}
  #allocation0 [shape = 'u32[]', space=smem, size = 0x4, offset = 0x4, fixed_abs, tag = 'smem constant byte address 0x4 - core index']
  #allocation1 [shape = 'u32[144,128]{1,0:T(1,128)}', space=vmem, size = 0x12000, scoped, tag = 'internal scratch']
  %s0 = inlined_call_operand.vmem [shape: f32[1,16,32], index: 0, kind: input, shape index: {}]
  %s1 = inlined_call_operand.vmem [shape: f32[32,8], index: 1, kind: input, shape index: {}]
  %s2 = inlined_call_operand.vmem [shape: f32[8,8], index: 2, kind: input, shape index: {}]
  %s3 = inlined_call_operand.vmem [shape: f32[1,2,64], index: 3, kind: output, shape index: {}]
  %s4 = sld [smem:[#allocation0]]
  $region22: #{sequential_classifier_forward.1} parent=0
    _
  %s6 = ssub.s32 1, %s4
  %s7 = scalar_select 0, %s6, %s4
  // Predicated region
  $region2: #{sequential_classifier_forward.1} parent=0 // pred_check
    _
  $region3: #{sequential_classifier_forward.1} parent=0 // pred_check_branch
    %9 = sbr.rel (0) target = $region5
  $region4: #{sequential_classifier_forward.1} parent=0 // pred_region
    _
  $region5: #{sequential_classifier_forward.1} parent=0 // pred_fallthru
    _
  // Predicated region
  $region6: #{sequential_classifier_forward.1} parent=0 // pred_check
    _
  $region7: #{sequential_classifier_forward.1} parent=0 // pred_check_branch
    %11 = sbr.rel (0) target = $region9
  $region8: #{sequential_classifier_forward.1} parent=0 // pred_region
    _
  $region9: #{sequential_classifier_forward.1} parent=0 // pred_fallthru
    _
  // Predicated region
  $region10: #{sequential_classifier_forward.1} parent=0 // pred_check
    _
  $region11: #{sequential_classifier_forward.1} parent=0 // pred_check_branch
    %13 = sbr.rel (0) target = $region13
  $region12: #{sequential_classifier_forward.1} parent=0 // pred_region
    _
  $region13: #{sequential_classifier_forward.1} parent=0 // pred_fallthru
    _
  %v14 = vld [vmem:[%s0] sm:$0xff]
  %v15 = vld [vmem:[%s0 + $0x8] sm:$0xff]
  %v16 = vld [vmem:[%s1] sm:$0xff]
  %v17 = vld [vmem:[%s1 + $0x8] sm:$0xff]
  %v18 = vld [vmem:[%s1 + $0x10] sm:$0xff]
  %v19 = vld [vmem:[%s1 + $0x18] sm:$0xff]
  %vm20 = vcmask 261120
  %v22 = vsel %vm20, %v14, 0
  %v25 = vsel %vm20, %v15, 0
  %27 = vmatprep.subr.mxu0 0.0
  %28 = vmatpush1.msra.mxu0 %v16
  %29 = vmatprep.subr.mxu0 0.0
  %30 = vmatpush1.msra.mxu0 %v17
  %31 = vmatprep.subr.mxu0 0.0
  %32 = vmatpush1.msra.mxu0 %v18
  %33 = vmatprep.subr.mxu0 0.0
  %34 = vmatpush1.msra.mxu0 %v19
  %35 = vmatprep.subr.mxu0 0.0
  %36 = vmatpush1.msra.mxu0 0.0
  %37 = vmatprep.subr.mxu0 0.0
  %38 = vmatpush1.msra.mxu0 0.0
  %39 = vmatprep.subr.mxu0 0.0
  %40 = vmatpush1.msra.mxu0 0.0
  %41 = vmatprep.subr.mxu0 0.0
  %42 = vmatpush1.msra.mxu0 0.0
  %43 = vmatprep.subr.mxu0 0.0
  %44 = vmatpush1.msra.mxu0 0.0
  %45 = vmatprep.subr.mxu0 0.0
  %46 = vmatpush1.msra.mxu0 0.0
  %47 = vmatprep.subr.mxu0 0.0
  %48 = vmatpush1.msra.mxu0 0.0
  %49 = vmatprep.subr.mxu0 0.0
  %50 = vmatpush1.msra.mxu0 0.0
  %51 = vmatprep.subr.mxu0 0.0
  %52 = vmatpush1.msra.mxu0 0.0
  %53 = vmatprep.subr.mxu0 0.0
  %54 = vmatpush1.msra.mxu0 0.0
  %55 = vmatprep.subr.mxu0 0.0
  %56 = vmatpush1.msra.mxu0 0.0
  %57 = vmatprep.subr.mxu0 0.0
  %58 = vmatpush1.msra.mxu0 0.0
  %59 = vmatprep.subr.mxu0 0.0
  %60 = vmatpush1.msra.mxu0 0.0
  %61 = vmatprep.subr.mxu0 0.0
  %62 = vmatpush1.msra.mxu0 0.0
  %63 = vmatprep.subr.mxu0 0.0
  %64 = vmatpush1.msra.mxu0 0.0
  %65 = vmatprep.subr.mxu0 0.0
  %66 = vmatpush1.msra.mxu0 0.0
  %67 = vmatprep.subr.mxu0 0.0
  %68 = vmatpush1.msra.mxu0 0.0
  %69 = vmatprep.subr.mxu0 0.0
  %70 = vmatpush1.msra.mxu0 0.0
  %71 = vmatprep.subr.mxu0 0.0
  %72 = vmatpush1.msra.mxu0 0.0
  %73 = vmatprep.subr.mxu0 0.0
  %74 = vmatpush1.msra.mxu0 0.0
  %75 = vmatprep.subr.mxu0 0.0
  %76 = vmatpush1.msra.mxu0 0.0
  %77 = vmatprep.subr.mxu0 0.0
  %78 = vmatpush1.msra.mxu0 0.0
  %79 = vmatprep.subr.mxu0 0.0
  %80 = vmatpush1.msra.mxu0 0.0
  %81 = vmatprep.subr.mxu0 0.0
  %82 = vmatpush1.msra.mxu0 0.0
  %83 = vmatprep.subr.mxu0 0.0
  %84 = vmatpush1.msra.mxu0 0.0
  %85 = vmatprep.subr.mxu0 0.0
  %86 = vmatpush1.msra.mxu0 0.0
  %87 = vmatprep.subr.mxu0 0.0
  %88 = vmatpush1.msra.mxu0 0.0
  %89 = vmatprep.subr.mxu0 0.0
  %90 = vmatpush1.msra.mxu0 0.0
  %91 = vmatprep.mubr.f32.mxu0 0.0
  %92 = vmatmul.mubr.f32.gmra.mrb[0].mxu0 %v22
  %v93 = vpop.f32.mrb[0].mxu0
  %v94 = vadd.f32 0.0, %v93
  %v95 = vpop.f32.mrb[0].mxu0
  %96 = vmatprep.mubr.f32.mxu0 0.0
  %97 = vmatmul.mubr.f32.gmra.mrb[0].mxu0 %v25
  %v98 = vpop.f32.mrb[0].mxu0
  %v99 = vadd.f32 0.0, %v98
  %v100 = vpop.f32.mrb[0].mxu0
  %101 = vdwg.mxu0
  %v102 = vld [vmem:[%s2] sm:$0xff]
  %v103 = vlaneseq
  %v104 = vand.u32 %v103, 127
  %v105 = vlaneseq
  %v106 = vshrl.u32 %v105, 7
  %v107 = vsub.s32 0, %v106
  %v108 = vrot.slane %v102, %v107
  %v109 = vadd.f32 %v94, %v108
  %vm110 = vcmask 58368
  %111 = vst.msk [vmem:[%s3] sm:$0x3] %vm110, %v109
  %v112 = vsel %vm110, %v109, -inf
  %113 = vmax.xlane.f32.xlu0 %v112
  %v114 = vpop.xlane.xlu0 %113
  %vm115 = vcmp.eq.f32.partialorder %v109, %v114
  %v116 = vsel %vm115, %v104, 8
  %v117 = vsel %vm110, %v116, 2147483647
  %v118 = vand.u32 %v117, 65535
  %v119 = vshra.s32 %v117, 16
  %v120 = vcvt.s32.f32 %v118
  %v121 = vcvt.s32.f32 %v119
  %122 = vmin.xlane.f32.xlu0 %v121
  %v123 = vpop.xlane.xlu0 %122
  %vm124 = vcmp.eq.f32.partialorder %v121, %v123
  %v125 = vsel %vm124, %v120, inf
  %126 = vmin.xlane.f32.xlu0 %v125
  %v127 = vpop.xlane.xlu0 %126
  %v128 = vcvt.f32.s32 %v127
  %v129 = vcvt.f32.s32 %v123
  %v130 = vshll.u32 %v129, 16
  %v131 = vadd.s32 %v130, %v128
  %vm132 = vcmp.eq.s32.totalorder %v104, %v131
  %v133 = vsel %vm132, 1, 0
  %v134 = vcvt.s32.f32 %v133
  %vm135 = vcmask 64512
  %v137 = vsel %vm135, %v134, 0
  %139 = vmatprep.subr.mxu0 0.0
  %140 = vmatpush1.msra.mxu0 %v102
  %141 = vmatprep.subr.mxu0 0.0
  %142 = vmatpush1.msra.mxu0 0.0
  %143 = vmatprep.subr.mxu0 0.0
  %144 = vmatpush1.msra.mxu0 0.0
  %145 = vmatprep.subr.mxu0 0.0
  %146 = vmatpush1.msra.mxu0 0.0
  %147 = vmatprep.subr.mxu0 0.0
  %148 = vmatpush1.msra.mxu0 0.0
  %149 = vmatprep.subr.mxu0 0.0
  %150 = vmatpush1.msra.mxu0 0.0
  %151 = vmatprep.subr.mxu0 0.0
  %152 = vmatpush1.msra.mxu0 0.0
  %153 = vmatprep.subr.mxu0 0.0
  %154 = vmatpush1.msra.mxu0 0.0
  %155 = vmatprep.subr.mxu0 0.0
  %156 = vmatpush1.msra.mxu0 0.0
  %157 = vmatprep.subr.mxu0 0.0
  %158 = vmatpush1.msra.mxu0 0.0
  %159 = vmatprep.subr.mxu0 0.0
  %160 = vmatpush1.msra.mxu0 0.0
  %161 = vmatprep.subr.mxu0 0.0
  %162 = vmatpush1.msra.mxu0 0.0
  %163 = vmatprep.subr.mxu0 0.0
  %164 = vmatpush1.msra.mxu0 0.0
  %165 = vmatprep.subr.mxu0 0.0
  %166 = vmatpush1.msra.mxu0 0.0
  %167 = vmatprep.subr.mxu0 0.0
  %168 = vmatpush1.msra.mxu0 0.0
  %169 = vmatprep.subr.mxu0 0.0
  %170 = vmatpush1.msra.mxu0 0.0
  %171 = vmatprep.subr.mxu0 0.0
  %172 = vmatpush1.msra.mxu0 0.0
  %173 = vmatprep.subr.mxu0 0.0
  %174 = vmatpush1.msra.mxu0 0.0
  %175 = vmatprep.subr.mxu0 0.0
  %176 = vmatpush1.msra.mxu0 0.0
  %177 = vmatprep.subr.mxu0 0.0
  %178 = vmatpush1.msra.mxu0 0.0
  %179 = vmatprep.subr.mxu0 0.0
  %180 = vmatpush1.msra.mxu0 0.0
  %181 = vmatprep.subr.mxu0 0.0
  %182 = vmatpush1.msra.mxu0 0.0
  %183 = vmatprep.subr.mxu0 0.0
  %184 = vmatpush1.msra.mxu0 0.0
  %185 = vmatprep.subr.mxu0 0.0
  %186 = vmatpush1.msra.mxu0 0.0
  %187 = vmatprep.subr.mxu0 0.0
  %188 = vmatpush1.msra.mxu0 0.0
  %189 = vmatprep.subr.mxu0 0.0
  %190 = vmatpush1.msra.mxu0 0.0
  %191 = vmatprep.subr.mxu0 0.0
  %192 = vmatpush1.msra.mxu0 0.0
  %193 = vmatprep.subr.mxu0 0.0
  %194 = vmatpush1.msra.mxu0 0.0
  %195 = vmatprep.subr.mxu0 0.0
  %196 = vmatpush1.msra.mxu0 0.0
  %197 = vmatprep.subr.mxu0 0.0
  %198 = vmatpush1.msra.mxu0 0.0
  %199 = vmatprep.subr.mxu0 0.0
  %200 = vmatpush1.msra.mxu0 0.0
  %201 = vmatprep.subr.mxu0 0.0
  %202 = vmatpush1.msra.mxu0 0.0
  %203 = vmatprep.mubr.f32.mxu0 0.0
  %204 = vmatmul.mubr.f32.gmra.mrb[0].mxu0 %v137
  %v205 = vpop.f32.mrb[0].mxu0
  %v206 = vadd.f32 0.0, %v205
  %v207 = vpop.f32.mrb[0].mxu0
  %208 = vdwg.mxu0
  %v210 = vrot.slane %v206, 6
  %v212 = vadd.f32 %v94, %v210
  %214 = vrot.lane.b32.xlu0 %v212, 8
  %v215 = vpop.permute.xlu0 %214
  %vm217 = vcmask 126018
  %218 = vst.msk [vmem:[%s3 - $0x2] sm:$0xc] %vm217, %v215
  %vm219 = vcmask 60418
  %v220 = vsel %vm219, %v212, -inf
  %221 = vmax.xlane.f32.xlu0 %v220
  %v222 = vpop.xlane.xlu0 %221
  %vm223 = vcmp.eq.f32.partialorder %v212, %v222
  %v224 = vsel %vm223, %v104, 8
  %v225 = vsel %vm219, %v224, 2147483647
  %v226 = vand.u32 %v225, 65535
  %v227 = vshra.s32 %v225, 16
  %v228 = vcvt.s32.f32 %v226
  %v229 = vcvt.s32.f32 %v227
  %230 = vmin.xlane.f32.xlu0 %v229
  %v231 = vpop.xlane.xlu0 %230
  %vm232 = vcmp.eq.f32.partialorder %v229, %v231
  %v233 = vsel %vm232, %v228, inf
  %234 = vmin.xlane.f32.xlu0 %v233
  %v235 = vpop.xlane.xlu0 %234
  %v236 = vcvt.f32.s32 %v235
  %v237 = vcvt.f32.s32 %v231
  %v238 = vshll.u32 %v237, 16
  %v239 = vadd.s32 %v238, %v236
  %vm240 = vcmp.eq.s32.totalorder %v104, %v239
  %v241 = vsel %vm240, 1, 0
  %v242 = vcvt.s32.f32 %v241
  %v244 = vrot.slane %v242, 2
  %v245 = vsel %vm135, %v244, 0
  %247 = vmatprep.subr.mxu0 0.0
  %248 = vmatpush1.msra.mxu0 %v102
  %249 = vmatprep.subr.mxu0 0.0
  %250 = vmatpush1.msra.mxu0 0.0
  %251 = vmatprep.subr.mxu0 0.0
  %252 = vmatpush1.msra.mxu0 0.0
  %253 = vmatprep.subr.mxu0 0.0
  %254 = vmatpush1.msra.mxu0 0.0
  %255 = vmatprep.subr.mxu0 0.0
  %256 = vmatpush1.msra.mxu0 0.0
  %257 = vmatprep.subr.mxu0 0.0
  %258 = vmatpush1.msra.mxu0 0.0
  %259 = vmatprep.subr.mxu0 0.0
  %260 = vmatpush1.msra.mxu0 0.0
  %261 = vmatprep.subr.mxu0 0.0
  %262 = vmatpush1.msra.mxu0 0.0
  %263 = vmatprep.subr.mxu0 0.0
  %264 = vmatpush1.msra.mxu0 0.0
  %265 = vmatprep.subr.mxu0 0.0
  %266 = vmatpush1.msra.mxu0 0.0
  %267 = vmatprep.subr.mxu0 0.0
  %268 = vmatpush1.msra.mxu0 0.0
  %269 = vmatprep.subr.mxu0 0.0
  %270 = vmatpush1.msra.mxu0 0.0
  %271 = vmatprep.subr.mxu0 0.0
  %272 = vmatpush1.msra.mxu0 0.0
  %273 = vmatprep.subr.mxu0 0.0
  %274 = vmatpush1.msra.mxu0 0.0
  %275 = vmatprep.subr.mxu0 0.0
  %276 = vmatpush1.msra.mxu0 0.0
  %277 = vmatprep.subr.mxu0 0.0
  %278 = vmatpush1.msra.mxu0 0.0
  %279 = vmatprep.subr.mxu0 0.0
  %280 = vmatpush1.msra.mxu0 0.0
  %281 = vmatprep.subr.mxu0 0.0
  %282 = vmatpush1.msra.mxu0 0.0
  %283 = vmatprep.subr.mxu0 0.0
  %284 = vmatpush1.msra.mxu0 0.0
  %285 = vmatprep.subr.mxu0 0.0
  %286 = vmatpush1.msra.mxu0 0.0
  %287 = vmatprep.subr.mxu0 0.0
  %288 = vmatpush1.msra.mxu0 0.0
  %289 = vmatprep.subr.mxu0 0.0
  %290 = vmatpush1.msra.mxu0 0.0
  %291 = vmatprep.subr.mxu0 0.0
  %292 = vmatpush1.msra.mxu0 0.0
  %293 = vmatprep.subr.mxu0 0.0
  %294 = vmatpush1.msra.mxu0 0.0
  %295 = vmatprep.subr.mxu0 0.0
  %296 = vmatpush1.msra.mxu0 0.0
  %297 = vmatprep.subr.mxu0 0.0
  %298 = vmatpush1.msra.mxu0 0.0
  %299 = vmatprep.subr.mxu0 0.0
  %300 = vmatpush1.msra.mxu0 0.0
  %301 = vmatprep.subr.mxu0 0.0
  %302 = vmatpush1.msra.mxu0 0.0
  %303 = vmatprep.subr.mxu0 0.0
  %304 = vmatpush1.msra.mxu0 0.0
  %305 = vmatprep.subr.mxu0 0.0
  %306 = vmatpush1.msra.mxu0 0.0
  %307 = vmatprep.subr.mxu0 0.0
  %308 = vmatpush1.msra.mxu0 0.0
  %309 = vmatprep.subr.mxu0 0.0
  %310 = vmatpush1.msra.mxu0 0.0
  %311 = vmatprep.mubr.f32.mxu0 0.0
  %312 = vmatmul.mubr.f32.gmra.mrb[0].mxu0 %v245
  %v313 = vpop.f32.mrb[0].mxu0
  %v314 = vadd.f32 0.0, %v313
  %v315 = vpop.f32.mrb[0].mxu0
  %316 = vdwg.mxu0
  %v318 = vrot.slane %v314, 4
  %v320 = vadd.f32 %v94, %v318
  %322 = vrot.lane.b32.xlu0 %v320, 16
  %v323 = vpop.permute.xlu0 %322
  %vm325 = vcmask 193668
  %326 = vst.msk [vmem:[%s3 - $0x4] sm:$0x30] %vm325, %v323
  %vm327 = vcmask 62468
  %v328 = vsel %vm327, %v320, -inf
  %329 = vmax.xlane.f32.xlu0 %v328
  %v330 = vpop.xlane.xlu0 %329
  %vm331 = vcmp.eq.f32.partialorder %v320, %v330
  %v332 = vsel %vm331, %v104, 8
  %v333 = vsel %vm327, %v332, 2147483647
  %v334 = vand.u32 %v333, 65535
  %v335 = vshra.s32 %v333, 16
  %v336 = vcvt.s32.f32 %v334
  %v337 = vcvt.s32.f32 %v335
  %338 = vmin.xlane.f32.xlu0 %v337
  %v339 = vpop.xlane.xlu0 %338
  %vm340 = vcmp.eq.f32.partialorder %v337, %v339
  %v341 = vsel %vm340, %v336, inf
  %342 = vmin.xlane.f32.xlu0 %v341
  %v343 = vpop.xlane.xlu0 %342
  %v344 = vcvt.f32.s32 %v343
  %v345 = vcvt.f32.s32 %v339
  %v346 = vshll.u32 %v345, 16
  %v347 = vadd.s32 %v346, %v344
  %vm348 = vcmp.eq.s32.totalorder %v104, %v347
  %v349 = vsel %vm348, 1, 0
  %v350 = vcvt.s32.f32 %v349
  %v352 = vrot.slane %v350, 4
  %v353 = vsel %vm135, %v352, 0
  %355 = vmatprep.subr.mxu0 0.0
  %356 = vmatpush1.msra.mxu0 %v102
  %357 = vmatprep.subr.mxu0 0.0
  %358 = vmatpush1.msra.mxu0 0.0
  %359 = vmatprep.subr.mxu0 0.0
  %360 = vmatpush1.msra.mxu0 0.0
  %361 = vmatprep.subr.mxu0 0.0
  %362 = vmatpush1.msra.mxu0 0.0
  %363 = vmatprep.subr.mxu0 0.0
  %364 = vmatpush1.msra.mxu0 0.0
  %365 = vmatprep.subr.mxu0 0.0
  %366 = vmatpush1.msra.mxu0 0.0
  %367 = vmatprep.subr.mxu0 0.0
  %368 = vmatpush1.msra.mxu0 0.0
  %369 = vmatprep.subr.mxu0 0.0
  %370 = vmatpush1.msra.mxu0 0.0
  %371 = vmatprep.subr.mxu0 0.0
  %372 = vmatpush1.msra.mxu0 0.0
  %373 = vmatprep.subr.mxu0 0.0
  %374 = vmatpush1.msra.mxu0 0.0
  %375 = vmatprep.subr.mxu0 0.0
  %376 = vmatpush1.msra.mxu0 0.0
  %377 = vmatprep.subr.mxu0 0.0
  %378 = vmatpush1.msra.mxu0 0.0
  %379 = vmatprep.subr.mxu0 0.0
  %380 = vmatpush1.msra.mxu0 0.0
  %381 = vmatprep.subr.mxu0 0.0
  %382 = vmatpush1.msra.mxu0 0.0
  %383 = vmatprep.subr.mxu0 0.0
  %384 = vmatpush1.msra.mxu0 0.0
  %385 = vmatprep.subr.mxu0 0.0
  %386 = vmatpush1.msra.mxu0 0.0
  %387 = vmatprep.subr.mxu0 0.0
  %388 = vmatpush1.msra.mxu0 0.0
  %389 = vmatprep.subr.mxu0 0.0
  %390 = vmatpush1.msra.mxu0 0.0
  %391 = vmatprep.subr.mxu0 0.0
  %392 = vmatpush1.msra.mxu0 0.0
  %393 = vmatprep.subr.mxu0 0.0
  %394 = vmatpush1.msra.mxu0 0.0
  %395 = vmatprep.subr.mxu0 0.0
  %396 = vmatpush1.msra.mxu0 0.0
  %397 = vmatprep.subr.mxu0 0.0
  %398 = vmatpush1.msra.mxu0 0.0
  %399 = vmatprep.subr.mxu0 0.0
  %400 = vmatpush1.msra.mxu0 0.0
  %401 = vmatprep.subr.mxu0 0.0
  %402 = vmatpush1.msra.mxu0 0.0
  %403 = vmatprep.subr.mxu0 0.0
  %404 = vmatpush1.msra.mxu0 0.0
  %405 = vmatprep.subr.mxu0 0.0
  %406 = vmatpush1.msra.mxu0 0.0
  %407 = vmatprep.subr.mxu0 0.0
  %408 = vmatpush1.msra.mxu0 0.0
  %409 = vmatprep.subr.mxu0 0.0
  %410 = vmatpush1.msra.mxu0 0.0
  %411 = vmatprep.subr.mxu0 0.0
  %412 = vmatpush1.msra.mxu0 0.0
  %413 = vmatprep.subr.mxu0 0.0
  %414 = vmatpush1.msra.mxu0 0.0
  %415 = vmatprep.subr.mxu0 0.0
  %416 = vmatpush1.msra.mxu0 0.0
  %417 = vmatprep.subr.mxu0 0.0
  %418 = vmatpush1.msra.mxu0 0.0
  %419 = vmatprep.mubr.f32.mxu0 0.0
  %420 = vmatmul.mubr.f32.gmra.mrb[0].mxu0 %v353
  %v421 = vpop.f32.mrb[0].mxu0
  %v422 = vadd.f32 0.0, %v421
  %v423 = vpop.f32.mrb[0].mxu0
  %424 = vdwg.mxu0
  %v426 = vrot.slane %v422, 2
  %v428 = vadd.f32 %v94, %v426
  %430 = vrot.lane.b32.xlu0 %v428, 24
  %v431 = vpop.permute.xlu0 %430
  %vm433 = vcmask 261318
  %434 = vst.msk [vmem:[%s3 - $0x6] sm:$0xc0] %vm433, %v431
  %vm435 = vcmask 64518
  %v436 = vsel %vm435, %v428, -inf
  %437 = vmax.xlane.f32.xlu0 %v436
  %v438 = vpop.xlane.xlu0 %437
  %vm439 = vcmp.eq.f32.partialorder %v428, %v438
  %v440 = vsel %vm439, %v104, 8
  %v441 = vsel %vm435, %v440, 2147483647
  %v442 = vand.u32 %v441, 65535
  %v443 = vshra.s32 %v441, 16
  %v444 = vcvt.s32.f32 %v442
  %v445 = vcvt.s32.f32 %v443
  %446 = vmin.xlane.f32.xlu0 %v445
  %v447 = vpop.xlane.xlu0 %446
  %vm448 = vcmp.eq.f32.partialorder %v445, %v447
  %v449 = vsel %vm448, %v444, inf
  %450 = vmin.xlane.f32.xlu0 %v449
  %v451 = vpop.xlane.xlu0 %450
  %v452 = vcvt.f32.s32 %v451
  %v453 = vcvt.f32.s32 %v447
  %v454 = vshll.u32 %v453, 16
  %v455 = vadd.s32 %v454, %v452
  %vm456 = vcmp.eq.s32.totalorder %v104, %v455
  %v457 = vsel %vm456, 1, 0
  %v458 = vcvt.s32.f32 %v457
  %v460 = vrot.slane %v458, 6
  %v461 = vsel %vm135, %v460, 0
  %463 = vmatprep.subr.mxu0 0.0
  %464 = vmatpush1.msra.mxu0 %v102
  %465 = vmatprep.subr.mxu0 0.0
  %466 = vmatpush1.msra.mxu0 0.0
  %467 = vmatprep.subr.mxu0 0.0
  %468 = vmatpush1.msra.mxu0 0.0
  %469 = vmatprep.subr.mxu0 0.0
  %470 = vmatpush1.msra.mxu0 0.0
  %471 = vmatprep.subr.mxu0 0.0
  %472 = vmatpush1.msra.mxu0 0.0
  %473 = vmatprep.subr.mxu0 0.0
  %474 = vmatpush1.msra.mxu0 0.0
  %475 = vmatprep.subr.mxu0 0.0
  %476 = vmatpush1.msra.mxu0 0.0
  %477 = vmatprep.subr.mxu0 0.0
  %478 = vmatpush1.msra.mxu0 0.0
  %479 = vmatprep.subr.mxu0 0.0
  %480 = vmatpush1.msra.mxu0 0.0
  %481 = vmatprep.subr.mxu0 0.0
  %482 = vmatpush1.msra.mxu0 0.0
  %483 = vmatprep.subr.mxu0 0.0
  %484 = vmatpush1.msra.mxu0 0.0
  %485 = vmatprep.subr.mxu0 0.0
  %486 = vmatpush1.msra.mxu0 0.0
  %487 = vmatprep.subr.mxu0 0.0
  %488 = vmatpush1.msra.mxu0 0.0
  %489 = vmatprep.subr.mxu0 0.0
  %490 = vmatpush1.msra.mxu0 0.0
  %491 = vmatprep.subr.mxu0 0.0
  %492 = vmatpush1.msra.mxu0 0.0
  %493 = vmatprep.subr.mxu0 0.0
  %494 = vmatpush1.msra.mxu0 0.0
  %495 = vmatprep.subr.mxu0 0.0
  %496 = vmatpush1.msra.mxu0 0.0
  %497 = vmatprep.subr.mxu0 0.0
  %498 = vmatpush1.msra.mxu0 0.0
  %499 = vmatprep.subr.mxu0 0.0
  %500 = vmatpush1.msra.mxu0 0.0
  %501 = vmatprep.subr.mxu0 0.0
  %502 = vmatpush1.msra.mxu0 0.0
  %503 = vmatprep.subr.mxu0 0.0
  %504 = vmatpush1.msra.mxu0 0.0
  %505 = vmatprep.subr.mxu0 0.0
  %506 = vmatpush1.msra.mxu0 0.0
  %507 = vmatprep.subr.mxu0 0.0
  %508 = vmatpush1.msra.mxu0 0.0
  %509 = vmatprep.subr.mxu0 0.0
  %510 = vmatpush1.msra.mxu0 0.0
  %511 = vmatprep.subr.mxu0 0.0
  %512 = vmatpush1.msra.mxu0 0.0
  %513 = vmatprep.subr.mxu0 0.0
  %514 = vmatpush1.msra.mxu0 0.0
  %515 = vmatprep.subr.mxu0 0.0
  %516 = vmatpush1.msra.mxu0 0.0
  %517 = vmatprep.subr.mxu0 0.0
  %518 = vmatpush1.msra.mxu0 0.0
  %519 = vmatprep.subr.mxu0 0.0
  %520 = vmatpush1.msra.mxu0 0.0
  %521 = vmatprep.subr.mxu0 0.0
  %522 = vmatpush1.msra.mxu0 0.0
  %523 = vmatprep.subr.mxu0 0.0
  %524 = vmatpush1.msra.mxu0 0.0
  %525 = vmatprep.subr.mxu0 0.0
  %526 = vmatpush1.msra.mxu0 0.0
  %527 = vmatprep.mubr.f32.mxu0 0.0
  %528 = vmatmul.mubr.f32.gmra.mrb[0].mxu0 %v461
  %v529 = vpop.f32.mrb[0].mxu0
  %v530 = vadd.f32 0.0, %v529
  %v531 = vpop.f32.mrb[0].mxu0
  %532 = vdwg.mxu0
  %v533 = vadd.f32 %v99, %v530
  %535 = vrot.lane.b32.xlu0 %v533, 32
  %v536 = vpop.permute.xlu0 %535
  %vm538 = vcmask 320768
  %539 = vst.msk [vmem:[%s3] sm:$0x3] %vm538, %v536
  %v540 = vsel %vm110, %v533, -inf
  %541 = vmax.xlane.f32.xlu0 %v540
  %v542 = vpop.xlane.xlu0 %541
  %vm543 = vcmp.eq.f32.partialorder %v533, %v542
  %v544 = vsel %vm543, %v104, 8
  %v545 = vsel %vm110, %v544, 2147483647
  %v546 = vand.u32 %v545, 65535
  %v547 = vshra.s32 %v545, 16
  %v548 = vcvt.s32.f32 %v546
  %v549 = vcvt.s32.f32 %v547
  %550 = vmin.xlane.f32.xlu0 %v549
  %v551 = vpop.xlane.xlu0 %550
  %vm552 = vcmp.eq.f32.partialorder %v549, %v551
  %v553 = vsel %vm552, %v548, inf
  %554 = vmin.xlane.f32.xlu0 %v553
  %v555 = vpop.xlane.xlu0 %554
  %v556 = vcvt.f32.s32 %v555
  %v557 = vcvt.f32.s32 %v551
  %v558 = vshll.u32 %v557, 16
  %v559 = vadd.s32 %v558, %v556
  %vm560 = vcmp.eq.s32.totalorder %v104, %v559
  %v561 = vsel %vm560, 1, 0
  %v562 = vcvt.s32.f32 %v561
  %v564 = vsel %vm135, %v562, 0
  %566 = vmatprep.subr.mxu0 0.0
  %567 = vmatpush1.msra.mxu0 %v102
  %568 = vmatprep.subr.mxu0 0.0
  %569 = vmatpush1.msra.mxu0 0.0
  %570 = vmatprep.subr.mxu0 0.0
  %571 = vmatpush1.msra.mxu0 0.0
  %572 = vmatprep.subr.mxu0 0.0
  %573 = vmatpush1.msra.mxu0 0.0
  %574 = vmatprep.subr.mxu0 0.0
  %575 = vmatpush1.msra.mxu0 0.0
  %576 = vmatprep.subr.mxu0 0.0
  %577 = vmatpush1.msra.mxu0 0.0
  %578 = vmatprep.subr.mxu0 0.0
  %579 = vmatpush1.msra.mxu0 0.0
  %580 = vmatprep.subr.mxu0 0.0
  %581 = vmatpush1.msra.mxu0 0.0
  %582 = vmatprep.subr.mxu0 0.0
  %583 = vmatpush1.msra.mxu0 0.0
  %584 = vmatprep.subr.mxu0 0.0
  %585 = vmatpush1.msra.mxu0 0.0
  %586 = vmatprep.subr.mxu0 0.0
  %587 = vmatpush1.msra.mxu0 0.0
  %588 = vmatprep.subr.mxu0 0.0
  %589 = vmatpush1.msra.mxu0 0.0
  %590 = vmatprep.subr.mxu0 0.0
  %591 = vmatpush1.msra.mxu0 0.0
  %592 = vmatprep.subr.mxu0 0.0
  %593 = vmatpush1.msra.mxu0 0.0
  %594 = vmatprep.subr.mxu0 0.0
  %595 = vmatpush1.msra.mxu0 0.0
  %596 = vmatprep.subr.mxu0 0.0
  %597 = vmatpush1.msra.mxu0 0.0
  %598 = vmatprep.subr.mxu0 0.0
  %599 = vmatpush1.msra.mxu0 0.0
  %600 = vmatprep.subr.mxu0 0.0
  %601 = vmatpush1.msra.mxu0 0.0
  %602 = vmatprep.subr.mxu0 0.0
  %603 = vmatpush1.msra.mxu0 0.0
  %604 = vmatprep.subr.mxu0 0.0
  %605 = vmatpush1.msra.mxu0 0.0
  %606 = vmatprep.subr.mxu0 0.0
  %607 = vmatpush1.msra.mxu0 0.0
  %608 = vmatprep.subr.mxu0 0.0
  %609 = vmatpush1.msra.mxu0 0.0
  %610 = vmatprep.subr.mxu0 0.0
  %611 = vmatpush1.msra.mxu0 0.0
  %612 = vmatprep.subr.mxu0 0.0
  %613 = vmatpush1.msra.mxu0 0.0
  %614 = vmatprep.subr.mxu0 0.0
  %615 = vmatpush1.msra.mxu0 0.0
  %616 = vmatprep.subr.mxu0 0.0
  %617 = vmatpush1.msra.mxu0 0.0
  %618 = vmatprep.subr.mxu0 0.0
  %619 = vmatpush1.msra.mxu0 0.0
  %620 = vmatprep.subr.mxu0 0.0
  %621 = vmatpush1.msra.mxu0 0.0
  %622 = vmatprep.subr.mxu0 0.0
  %623 = vmatpush1.msra.mxu0 0.0
  %624 = vmatprep.subr.mxu0 0.0
  %625 = vmatpush1.msra.mxu0 0.0
  %626 = vmatprep.subr.mxu0 0.0
  %627 = vmatpush1.msra.mxu0 0.0
  %628 = vmatprep.subr.mxu0 0.0
  %629 = vmatpush1.msra.mxu0 0.0
  %630 = vmatprep.mubr.f32.mxu0 0.0
  %631 = vmatmul.mubr.f32.gmra.mrb[0].mxu0 %v564
  %v632 = vpop.f32.mrb[0].mxu0
  %v633 = vadd.f32 0.0, %v632
  %v634 = vpop.f32.mrb[0].mxu0
  %635 = vdwg.mxu0
  %v637 = vrot.slane %v633, 6
  %v639 = vadd.f32 %v99, %v637
  %641 = vrot.lane.b32.xlu0 %v639, 40
  %v642 = vpop.permute.xlu0 %641
  %vm644 = vcmask 388418
  %645 = vst.msk [vmem:[%s3 - $0x2] sm:$0xc] %vm644, %v642
  %v646 = vsel %vm219, %v639, -inf
  %647 = vmax.xlane.f32.xlu0 %v646
  %v648 = vpop.xlane.xlu0 %647
  %vm649 = vcmp.eq.f32.partialorder %v639, %v648
  %v650 = vsel %vm649, %v104, 8
  %v651 = vsel %vm219, %v650, 2147483647
  %v652 = vand.u32 %v651, 65535
  %v653 = vshra.s32 %v651, 16
  %v654 = vcvt.s32.f32 %v652
  %v655 = vcvt.s32.f32 %v653
  %656 = vmin.xlane.f32.xlu0 %v655
  %v657 = vpop.xlane.xlu0 %656
  %vm658 = vcmp.eq.f32.partialorder %v655, %v657
  %v659 = vsel %vm658, %v654, inf
  %660 = vmin.xlane.f32.xlu0 %v659
  %v661 = vpop.xlane.xlu0 %660
  %v662 = vcvt.f32.s32 %v661
  %v663 = vcvt.f32.s32 %v657
  %v664 = vshll.u32 %v663, 16
  %v665 = vadd.s32 %v664, %v662
  %vm666 = vcmp.eq.s32.totalorder %v104, %v665
  %v667 = vsel %vm666, 1, 0
  %v668 = vcvt.s32.f32 %v667
  %v670 = vrot.slane %v668, 2
  %v671 = vsel %vm135, %v670, 0
  %673 = vmatprep.subr.mxu0 0.0
  %674 = vmatpush1.msra.mxu0 %v102
  %675 = vmatprep.subr.mxu0 0.0
  %676 = vmatpush1.msra.mxu0 0.0
  %677 = vmatprep.subr.mxu0 0.0
  %678 = vmatpush1.msra.mxu0 0.0
  %679 = vmatprep.subr.mxu0 0.0
  %680 = vmatpush1.msra.mxu0 0.0
  %681 = vmatprep.subr.mxu0 0.0
  %682 = vmatpush1.msra.mxu0 0.0
  %683 = vmatprep.subr.mxu0 0.0
  %684 = vmatpush1.msra.mxu0 0.0
  %685 = vmatprep.subr.mxu0 0.0
  %686 = vmatpush1.msra.mxu0 0.0
  %687 = vmatprep.subr.mxu0 0.0
  %688 = vmatpush1.msra.mxu0 0.0
  %689 = vmatprep.subr.mxu0 0.0
  %690 = vmatpush1.msra.mxu0 0.0
  %691 = vmatprep.subr.mxu0 0.0
  %692 = vmatpush1.msra.mxu0 0.0
  %693 = vmatprep.subr.mxu0 0.0
  %694 = vmatpush1.msra.mxu0 0.0
  %695 = vmatprep.subr.mxu0 0.0
  %696 = vmatpush1.msra.mxu0 0.0
  %697 = vmatprep.subr.mxu0 0.0
  %698 = vmatpush1.msra.mxu0 0.0
  %699 = vmatprep.subr.mxu0 0.0
  %700 = vmatpush1.msra.mxu0 0.0
  %701 = vmatprep.subr.mxu0 0.0
  %702 = vmatpush1.msra.mxu0 0.0
  %703 = vmatprep.subr.mxu0 0.0
  %704 = vmatpush1.msra.mxu0 0.0
  %705 = vmatprep.subr.mxu0 0.0
  %706 = vmatpush1.msra.mxu0 0.0
  %707 = vmatprep.subr.mxu0 0.0
  %708 = vmatpush1.msra.mxu0 0.0
  %709 = vmatprep.subr.mxu0 0.0
  %710 = vmatpush1.msra.mxu0 0.0
  %711 = vmatprep.subr.mxu0 0.0
  %712 = vmatpush1.msra.mxu0 0.0
  %713 = vmatprep.subr.mxu0 0.0
  %714 = vmatpush1.msra.mxu0 0.0
  %715 = vmatprep.subr.mxu0 0.0
  %716 = vmatpush1.msra.mxu0 0.0
  %717 = vmatprep.subr.mxu0 0.0
  %718 = vmatpush1.msra.mxu0 0.0
  %719 = vmatprep.subr.mxu0 0.0
  %720 = vmatpush1.msra.mxu0 0.0
  %721 = vmatprep.subr.mxu0 0.0
  %722 = vmatpush1.msra.mxu0 0.0
  %723 = vmatprep.subr.mxu0 0.0
  %724 = vmatpush1.msra.mxu0 0.0
  %725 = vmatprep.subr.mxu0 0.0
  %726 = vmatpush1.msra.mxu0 0.0
  %727 = vmatprep.subr.mxu0 0.0
  %728 = vmatpush1.msra.mxu0 0.0
  %729 = vmatprep.subr.mxu0 0.0
  %730 = vmatpush1.msra.mxu0 0.0
  %731 = vmatprep.subr.mxu0 0.0
  %732 = vmatpush1.msra.mxu0 0.0
  %733 = vmatprep.subr.mxu0 0.0
  %734 = vmatpush1.msra.mxu0 0.0
  %735 = vmatprep.subr.mxu0 0.0
  %736 = vmatpush1.msra.mxu0 0.0
  %737 = vmatprep.mubr.f32.mxu0 0.0
  %738 = vmatmul.mubr.f32.gmra.mrb[0].mxu0 %v671
  %v739 = vpop.f32.mrb[0].mxu0
  %v740 = vadd.f32 0.0, %v739
  %v741 = vpop.f32.mrb[0].mxu0
  %742 = vdwg.mxu0
  %v744 = vrot.slane %v740, 4
  %v746 = vadd.f32 %v99, %v744
  %748 = vrot.lane.b32.xlu0 %v746, 48
  %v749 = vpop.permute.xlu0 %748
  %vm751 = vcmask 456068
  %752 = vst.msk [vmem:[%s3 - $0x4] sm:$0x30] %vm751, %v749
  %v753 = vsel %vm327, %v746, -inf
  %754 = vmax.xlane.f32.xlu0 %v753
  %v755 = vpop.xlane.xlu0 %754
  %vm756 = vcmp.eq.f32.partialorder %v746, %v755
  %v757 = vsel %vm756, %v104, 8
  %v758 = vsel %vm327, %v757, 2147483647
  %v759 = vand.u32 %v758, 65535
  %v760 = vshra.s32 %v758, 16
  %v761 = vcvt.s32.f32 %v759
  %v762 = vcvt.s32.f32 %v760
  %763 = vmin.xlane.f32.xlu0 %v762
  %v764 = vpop.xlane.xlu0 %763
  %vm765 = vcmp.eq.f32.partialorder %v762, %v764
  %v766 = vsel %vm765, %v761, inf
  %767 = vmin.xlane.f32.xlu0 %v766
  %v768 = vpop.xlane.xlu0 %767
  %v769 = vcvt.f32.s32 %v768
  %v770 = vcvt.f32.s32 %v764
  %v771 = vshll.u32 %v770, 16
  %v772 = vadd.s32 %v771, %v769
  %vm773 = vcmp.eq.s32.totalorder %v104, %v772
  %v774 = vsel %vm773, 1, 0
  %v775 = vcvt.s32.f32 %v774
  %v777 = vrot.slane %v775, 4
  %v778 = vsel %vm135, %v777, 0
  %780 = vmatprep.subr.mxu0 0.0
  %781 = vmatpush1.msra.mxu0 %v102
  %782 = vmatprep.subr.mxu0 0.0
  %783 = vmatpush1.msra.mxu0 0.0
  %784 = vmatprep.subr.mxu0 0.0
  %785 = vmatpush1.msra.mxu0 0.0
  %786 = vmatprep.subr.mxu0 0.0
  %787 = vmatpush1.msra.mxu0 0.0
  %788 = vmatprep.subr.mxu0 0.0
  %789 = vmatpush1.msra.mxu0 0.0
  %790 = vmatprep.subr.mxu0 0.0
  %791 = vmatpush1.msra.mxu0 0.0
  %792 = vmatprep.subr.mxu0 0.0
  %793 = vmatpush1.msra.mxu0 0.0
  %794 = vmatprep.subr.mxu0 0.0
  %795 = vmatpush1.msra.mxu0 0.0
  %796 = vmatprep.subr.mxu0 0.0
  %797 = vmatpush1.msra.mxu0 0.0
  %798 = vmatprep.subr.mxu0 0.0
  %799 = vmatpush1.msra.mxu0 0.0
  %800 = vmatprep.subr.mxu0 0.0
  %801 = vmatpush1.msra.mxu0 0.0
  %802 = vmatprep.subr.mxu0 0.0
  %803 = vmatpush1.msra.mxu0 0.0
  %804 = vmatprep.subr.mxu0 0.0
  %805 = vmatpush1.msra.mxu0 0.0
  %806 = vmatprep.subr.mxu0 0.0
  %807 = vmatpush1.msra.mxu0 0.0
  %808 = vmatprep.subr.mxu0 0.0
  %809 = vmatpush1.msra.mxu0 0.0
  %810 = vmatprep.subr.mxu0 0.0
  %811 = vmatpush1.msra.mxu0 0.0
  %812 = vmatprep.subr.mxu0 0.0
  %813 = vmatpush1.msra.mxu0 0.0
  %814 = vmatprep.subr.mxu0 0.0
  %815 = vmatpush1.msra.mxu0 0.0
  %816 = vmatprep.subr.mxu0 0.0
  %817 = vmatpush1.msra.mxu0 0.0
  %818 = vmatprep.subr.mxu0 0.0
  %819 = vmatpush1.msra.mxu0 0.0
  %820 = vmatprep.subr.mxu0 0.0
  %821 = vmatpush1.msra.mxu0 0.0
  %822 = vmatprep.subr.mxu0 0.0
  %823 = vmatpush1.msra.mxu0 0.0
  %824 = vmatprep.subr.mxu0 0.0
  %825 = vmatpush1.msra.mxu0 0.0
  %826 = vmatprep.subr.mxu0 0.0
  %827 = vmatpush1.msra.mxu0 0.0
  %828 = vmatprep.subr.mxu0 0.0
  %829 = vmatpush1.msra.mxu0 0.0
  %830 = vmatprep.subr.mxu0 0.0
  %831 = vmatpush1.msra.mxu0 0.0
  %832 = vmatprep.subr.mxu0 0.0
  %833 = vmatpush1.msra.mxu0 0.0
  %834 = vmatprep.subr.mxu0 0.0
  %835 = vmatpush1.msra.mxu0 0.0
  %836 = vmatprep.subr.mxu0 0.0
  %837 = vmatpush1.msra.mxu0 0.0
  %838 = vmatprep.subr.mxu0 0.0
  %839 = vmatpush1.msra.mxu0 0.0
  %840 = vmatprep.subr.mxu0 0.0
  %841 = vmatpush1.msra.mxu0 0.0
  %842 = vmatprep.subr.mxu0 0.0
  %843 = vmatpush1.msra.mxu0 0.0
  %844 = vmatprep.mubr.f32.mxu0 0.0
  %845 = vmatmul.mubr.f32.gmra.mrb[0].mxu0 %v778
  %v846 = vpop.f32.mrb[0].mxu0
  %v847 = vadd.f32 0.0, %v846
  %v848 = vpop.f32.mrb[0].mxu0
  %849 = vdwg.mxu0
  %v851 = vrot.slane %v847, 2
  %v853 = vadd.f32 %v99, %v851
  %855 = vrot.lane.b32.xlu0 %v853, 56
  %v856 = vpop.permute.xlu0 %855
  %vm858 = vcmask 523718
  %859 = vst.msk [vmem:[%s3 - $0x6] sm:$0xc0] %vm858, %v856
  // Predicated region
  $region14: #{sequential_classifier_forward.1} parent=0 // pred_check
    _
  $region15: #{sequential_classifier_forward.1} parent=0 // pred_check_branch
    %861 = sbr.rel (0) target = $region17
  $region16: #{sequential_classifier_forward.1} parent=0 // pred_region
    _
  $region17: #{sequential_classifier_forward.1} parent=0 // pred_fallthru
    _
  // Predicated region
  $region18: #{sequential_classifier_forward.1} parent=0 // pred_check
    _
  $region19: #{sequential_classifier_forward.1} parent=0 // pred_check_branch
    %863 = sbr.rel (0) target = $region21
  $region20: #{sequential_classifier_forward.1} parent=0 // pred_region
    _
  $region21: #{sequential_classifier_forward.1} parent=0 // pred_fallthru
    _

</llo_original>
